<compile_context>
chip_gen: v7x
topology: tpu7x:2x2x1
jax: 0.10.0
libtpu: 0.0.40
codegen_flags: <defaults>
</compile_context>

<pallas_src>
import jax
import jax.numpy as jnp
from jax.experimental import pallas as pl
from jax.experimental.pallas import tpu as pltpu

_HALO = 128  # lane-tile-aligned halo; supports kernel_size - 1 <= 128


def _round_up(a, b):
    return (a + b - 1) // b * b


def _choose_tile(m, tile_m_max):
    """Balanced, 128-aligned lane tiling: pad waste < 128 columns per tile."""
    tile_m_max = max(128, _round_up(tile_m_max, 128))
    num = max(1, -(-m // tile_m_max))           # cdiv
    tile = _round_up(-(-m // num), 128)         # balance tiles, keep 128-aligned
    return tile, num * tile                     # (tile_m, M_pad)


def _timeblock_kernel(x_ref, h_ref, w_ref, b_ref, out_ref):
    """One lane-dense tile of the fused TimeBlock forward.

    x_ref  : (Cin, tile_m)     main input window; columns index (bn, t)
    h_ref  : (Cin, 128)        halo: the 128 columns just after the main window
    w_ref  : (3*Cout, K*Cin)   conv1/conv2/conv3 weights stacked on rows
    b_ref  : (3*Cout, 1)       f32 biases
    out_ref: (Cout, tile_m)    relu(c1 + sigmoid(c2) + c3)
    """
    cin, tile_m = x_ref.shape
    ksize = w_ref.shape[1] // cin
    cout = out_ref.shape[0]

    # Overlapping window so tap k can read columns [k, k + tile_m).
    xe = jnp.concatenate([x_ref[...], h_ref[...]], axis=1)   # (Cin, tile_m + 128)
    w = w_ref[...]

    # K small MXU matmuls (contraction = Cin) accumulated in f32; no im2col
    # copy is ever materialized, the per-tap lane shift is cheap XLU work.
    acc = None
    for k in range(ksize):
        xk = xe[:, k:k + tile_m]                              # (Cin, tile_m)
        wk = w[:, k * cin:(k + 1) * cin]                      # (3*Cout, Cin)
        part = jnp.dot(wk, xk, preferred_element_type=jnp.float32)
        acc = part if acc is None else acc + part

    y = acc + b_ref[...].astype(jnp.float32)                  # (3*Cout, tile_m) f32
    c1 = y[0 * cout:1 * cout, :]
    c2 = y[1 * cout:2 * cout, :]
    c3 = y[2 * cout:3 * cout, :]
    sig = 1.0 / (1.0 + jnp.exp(-c2))                          # EUP exp + VPU div (f32)
    temp = c1 + sig + c3                                      # f32 epilogue (v5e-safe)
    out_ref[...] = jnp.maximum(temp, 0.0).astype(out_ref.dtype)


def timeblock_forward(x, params, *, kernel_size=3, tile_m=16384,
                      compute_dtype=jnp.bfloat16, out_dtype=None,
                      channel_major_output=False):
    """x: (B, N, T, Cin) -> (B, N, T-K+1, Cout).

    All conv/gating compute happens inside the Pallas kernel; the wrapper only
    does layout plumbing (channel-major slab, weight packing, final reshape).
    """
    B, N, T, Cin = x.shape
    K = kernel_size
    assert 1 <= K <= _HALO + 1, "128-column halo supports kernel_size <= 129"
    T_out = T - K + 1
    assert T_out >= 1, "need T >= kernel_size"
    w1, b1, w2, b2, w3, b3 = params
    Cout = w1.shape[-1]
    KC = K * Cin

    BN = B * N
    M = BN * T  # one output column per (bn, t); per-row invalid tails discarded later

    cd = jnp.dtype(compute_dtype) if compute_dtype is not None else jnp.dtype(x.dtype)
    od = jnp.dtype(out_dtype) if out_dtype is not None else jnp.dtype(x.dtype)

    # --- lane-dense input slab (no im2col duplication) ----------------------
    tile_m, M_pad = _choose_tile(M, tile_m)
    slab = x.reshape(BN, T, Cin).transpose(2, 0, 1).reshape(Cin, M).astype(cd)
    slab = jnp.pad(slab, ((0, 0), (0, M_pad + _HALO - M)))    # keep halo reads in-bounds

    # --- pack the 3 convs into a single weight / bias -----------------------
    def pack_w(w):  # (K, Cin, Cout) -> (Cout, K*Cin); column index = k*Cin + cin
        return w.reshape(KC, Cout).T

    w_big = jnp.concatenate([pack_w(w1), pack_w(w2), pack_w(w3)], axis=0).astype(cd)
    b_big = jnp.concatenate([b1, b2, b3], axis=1).T.astype(jnp.float32)   # (3*Cout, 1)

    grid = (M_pad // tile_m,)
    lanes_per_tile = tile_m // 128

    flops = 2 * M_pad * KC * (3 * Cout) + 6 * M_pad * Cout
    bytes_accessed = (slab.size * slab.dtype.itemsize
                      + w_big.size * w_big.dtype.itemsize
                      + b_big.size * b_big.dtype.itemsize
                      + Cout * M_pad * od.itemsize)

    out_t = pl.pallas_call(
        _timeblock_kernel,
        out_shape=jax.ShapeDtypeStruct((Cout, M_pad), od),
        grid_spec=pltpu.PrefetchScalarGridSpec(
            num_scalar_prefetch=0,
            grid=grid,
            in_specs=[
                pl.BlockSpec((Cin, tile_m), lambda i: (0, i)),
                pl.BlockSpec((Cin, _HALO), lambda i: (0, (i + 1) * lanes_per_tile)),
                pl.BlockSpec((3 * Cout, KC), lambda i: (0, 0)),
                pl.BlockSpec((3 * Cout, 1), lambda i: (0, 0)),
            ],
            out_specs=pl.BlockSpec((Cout, tile_m), lambda i: (0, i)),
        ),
        compiler_params=pltpu.CompilerParams(
            dimension_semantics=("parallel",),        # shard M axis across cores
            vmem_limit_bytes=32 * 1024 * 1024,        # modest: fits v7x 64 MiB/TC
        ),
        cost_estimate=pl.CostEstimate(
            flops=flops,
            transcendentals=M_pad * Cout,
            bytes_accessed=bytes_accessed,
        ),
    )(slab, slab, w_big, b_big)

    # Drop padded columns and the K-1 invalid tail columns of each (b, n) row.
    out = out_t[:, :M].reshape(Cout, BN, T)[:, :, :T_out]      # (Cout, BN, T_out)
    if channel_major_output:
        # Lane-dense, transpose-free layout for a fused downstream consumer
        # (e.g. the STGCN spatial matmul contracts over Cout anyway).
        return out.reshape(Cout, B, N, T_out)
    return out.transpose(1, 2, 0).reshape(B, N, T_out, Cout)


def init_params(key, in_channels, out_channels, kernel_size):
    """Deterministic synthetic params.

    Torch conv weight is (Cout, Cin, 1, K); here each conv is stored as
    (K, Cin, Cout) so weight[k] multiplies the channel dim directly.
    """
    keys = jax.random.split(key, 6)
    scale = 0.1

    def w(k):
        return (scale * jax.random.normal(
            k, (kernel_size, in_channels, out_channels))).astype(jnp.float32)

    def b(k):
        return (scale * jax.random.normal(
            k, (1, out_channels))).astype(jnp.float32)

    return (w(keys[0]), b(keys[1]), w(keys[2]), b(keys[3]), w(keys[4]), b(keys[5]))


def _reference(x, params, kernel_size):
    """Pure-JAX reference of the TimeBlock forward for verification."""
    w1, b1, w2, b2, w3, b3 = params
    B, N, T, Cin = x.shape
    K = kernel_size
    T_out = T - K + 1

    def conv(w, b):
        acc = jnp.zeros((B, N, T_out, w.shape[-1]), jnp.float32)
        for k in range(K):
            acc = acc + jnp.einsum("bntc,cd->bntd", x[:, :, k:k + T_out, :], w[k])
        return acc + b[0][None, None, None, :]

    temp = conv(w1, b1) + jax.nn.sigmoid(conv(w2, b2)) + conv(w3, b3)
    return jnp.maximum(temp, 0.0)


if __name__ == "__main__":
    # Small shapes consistent with STGCN TimeBlock:
    # batch=2, num_nodes=8, num_timesteps=12, in_channels=4, out_channels=8, K=3
    B, N, T, Cin, Cout, K = 2, 8, 12, 4, 8, 3

    key = jax.random.PRNGKey(0)
    kx, kp = jax.random.split(key)
    x = jax.random.normal(kx, (B, N, T, Cin), dtype=jnp.float32)
    params = init_params(kp, Cin, Cout, K)

    ref = _reference(x, params, K)

    # Default path: bf16 matmul operands, f32 accumulation + epilogue.
    out = jax.block_until_ready(timeblock_forward(x, params, kernel_size=K))
    assert out.shape == (B, N, T - K + 1, Cout)
    assert jnp.allclose(out, ref, atol=2e-2, rtol=2e-2)

    # Full-f32 path for a tight numerical check.
    out_f32 = jax.block_until_ready(
        timeblock_forward(x, params, kernel_size=K, compute_dtype=jnp.float32))
    assert jnp.allclose(out_f32, ref, atol=1e-4, rtol=1e-4)

    print("KERNEL_OK")
</pallas_src>

<mosaic_0001>
module attributes {stable_mosaic.version = 11 : i64} {
  func.func @_timeblock_kernel(%arg0: i32, %arg1: memref<4x256xbf16, #tpu.memory_space<vmem>>, %arg2: memref<4x128xbf16, #tpu.memory_space<vmem>>, %arg3: memref<24x12xbf16, #tpu.memory_space<vmem>>, %arg4: memref<24x1xf32, #tpu.memory_space<vmem>>, %arg5: memref<8x256xf32, #tpu.memory_space<vmem>>) attributes {dimension_semantics = [#tpu.dimension_semantics<parallel>], iteration_bounds = array<i64: 1>, scalar_prefetch = 0 : i64, scratch_operands = 0 : i64, tpu.core_type = #tpu.core_type<tc>, window_params = [{transform_indices = @transform_0, window_bounds = array<i64: 4, 256>}, {transform_indices = @transform_1, window_bounds = array<i64: 4, 128>}, {pipeline_mode = #tpu.pipeline_mode<synchronous>, transform_indices = @transform_2, window_bounds = array<i64: 24, 12>}, {pipeline_mode = #tpu.pipeline_mode<synchronous>, transform_indices = @transform_3, window_bounds = array<i64: 24, 1>}, {transform_indices = @transform_4, window_bounds = array<i64: 8, 256>}]} {
    %c0 = arith.constant 0 : index
    %c0_0 = arith.constant 0 : index
    %0 = vector.load %arg1[%c0, %c0_0] : memref<4x256xbf16, #tpu.memory_space<vmem>>, vector<4x256xbf16>
    %c0_1 = arith.constant 0 : index
    %c0_2 = arith.constant 0 : index
    %1 = vector.load %arg2[%c0_1, %c0_2] : memref<4x128xbf16, #tpu.memory_space<vmem>>, vector<4x128xbf16>
    %2 = tpu.concatenate %0, %1 in 1 : vector<4x256xbf16>, vector<4x128xbf16> -> vector<4x384xbf16>
    %c0_3 = arith.constant 0 : index
    %c0_4 = arith.constant 0 : index
    %3 = vector.load %arg3[%c0_3, %c0_4] : memref<24x12xbf16, #tpu.memory_space<vmem>>, vector<24x12xbf16>
    %4 = vector.extract_strided_slice %2 {offsets = [0, 0], sizes = [4, 256], strides = [1, 1]} : vector<4x384xbf16> to vector<4x256xbf16>
    %5 = vector.extract_strided_slice %3 {offsets = [0, 0], sizes = [24, 4], strides = [1, 1]} : vector<24x12xbf16> to vector<24x4xbf16>
    %cst = arith.constant dense<0.000000e+00> : vector<24x256xf32>
    %6 = tpu.matmul %5, %4, %cst {dimension_numbers = #tpu.dot_dimension_numbers<[1], [0], [0], [1], [0, 0, 1, 1], [], []>} : vector<24x4xbf16>, vector<4x256xbf16>, vector<24x256xf32> -> vector<24x256xf32>
    %7 = vector.extract_strided_slice %2 {offsets = [0, 1], sizes = [4, 256], strides = [1, 1]} : vector<4x384xbf16> to vector<4x256xbf16>
    %8 = vector.extract_strided_slice %3 {offsets = [0, 4], sizes = [24, 4], strides = [1, 1]} : vector<24x12xbf16> to vector<24x4xbf16>
    %cst_5 = arith.constant dense<0.000000e+00> : vector<24x256xf32>
    %9 = tpu.matmul %8, %7, %cst_5 {dimension_numbers = #tpu.dot_dimension_numbers<[1], [0], [0], [1], [0, 0, 1, 1], [], []>} : vector<24x4xbf16>, vector<4x256xbf16>, vector<24x256xf32> -> vector<24x256xf32>
    %10 = arith.addf %6, %9 : vector<24x256xf32>
    %11 = vector.extract_strided_slice %2 {offsets = [0, 2], sizes = [4, 256], strides = [1, 1]} : vector<4x384xbf16> to vector<4x256xbf16>
    %12 = vector.extract_strided_slice %3 {offsets = [0, 8], sizes = [24, 4], strides = [1, 1]} : vector<24x12xbf16> to vector<24x4xbf16>
    %cst_6 = arith.constant dense<0.000000e+00> : vector<24x256xf32>
    %13 = tpu.matmul %12, %11, %cst_6 {dimension_numbers = #tpu.dot_dimension_numbers<[1], [0], [0], [1], [0, 0, 1, 1], [], []>} : vector<24x4xbf16>, vector<4x256xbf16>, vector<24x256xf32> -> vector<24x256xf32>
    %14 = arith.addf %10, %13 : vector<24x256xf32>
    %c0_7 = arith.constant 0 : index
    %c0_8 = arith.constant 0 : index
    %15 = vector.load %arg4[%c0_7, %c0_8] : memref<24x1xf32, #tpu.memory_space<vmem>>, vector<24x1xf32>
    %16 = vector.broadcast %15 : vector<24x1xf32> to vector<24x256xf32>
    %17 = arith.addf %14, %16 : vector<24x256xf32>
    %18 = vector.extract_strided_slice %17 {offsets = [0, 0], sizes = [8, 256], strides = [1, 1]} : vector<24x256xf32> to vector<8x256xf32>
    %19 = vector.extract_strided_slice %17 {offsets = [8, 0], sizes = [8, 256], strides = [1, 1]} : vector<24x256xf32> to vector<8x256xf32>
    %20 = vector.extract_strided_slice %17 {offsets = [16, 0], sizes = [8, 256], strides = [1, 1]} : vector<24x256xf32> to vector<8x256xf32>
    %cst_9 = arith.constant 0.000000e+00 : f32
    %21 = vector.broadcast %cst_9 : f32 to vector<8x256xf32>
    %22 = arith.subf %21, %19 : vector<8x256xf32>
    %23 = math.exp %22 : vector<8x256xf32>
    %cst_10 = arith.constant 1.000000e+00 : f32
    %24 = vector.broadcast %cst_10 : f32 to vector<8x256xf32>
    %25 = arith.addf %24, %23 : vector<8x256xf32>
    %cst_11 = arith.constant 1.000000e+00 : f32
    %26 = vector.broadcast %cst_11 : f32 to vector<8x256xf32>
    %27 = arith.divf %26, %25 : vector<8x256xf32>
    %28 = arith.addf %18, %27 : vector<8x256xf32>
    %29 = arith.addf %28, %20 : vector<8x256xf32>
    %cst_12 = arith.constant 0.000000e+00 : f32
    %30 = vector.broadcast %cst_12 : f32 to vector<8x256xf32>
    %31 = arith.maximumf %29, %30 : vector<8x256xf32>
    %c0_13 = arith.constant 0 : index
    %c0_14 = arith.constant 0 : index
    %32 = vector.load %arg5[%c0_13, %c0_14] : memref<8x256xf32, #tpu.memory_space<vmem>>, vector<8x256xf32>
    tpu.vector_store %arg5[%c0_13, %c0_14], %31 {strides = array<i32>} : memref<8x256xf32, #tpu.memory_space<vmem>>, vector<8x256xf32>,
    return
  }
  func.func @transform_0(%arg0: i32) -> (i32, i32) {
    %c0_i32 = arith.constant 0 : i32
    %c0_i32_0 = arith.constant 0 : i32
    return %c0_i32, %arg0 : i32, i32
  }
  func.func @transform_1(%arg0: i32) -> (i32, i32) {
    %c1_i32 = arith.constant 1 : i32
    %0 = arith.addi %arg0, %c1_i32 : i32
    %c2_i32 = arith.constant 2 : i32
    %1 = arith.muli %0, %c2_i32 : i32
    %c0_i32 = arith.constant 0 : i32
    %c0_i32_0 = arith.constant 0 : i32
    return %c0_i32, %1 : i32, i32
  }
  func.func @transform_2(%arg0: i32) -> (i32, i32) {
    %c0_i32 = arith.constant 0 : i32
    %c0_i32_0 = arith.constant 0 : i32
    %c0_i32_1 = arith.constant 0 : i32
    return %c0_i32, %c0_i32_0 : i32, i32
  }
  func.func @transform_3(%arg0: i32) -> (i32, i32) {
    %c0_i32 = arith.constant 0 : i32
    %c0_i32_0 = arith.constant 0 : i32
    %c0_i32_1 = arith.constant 0 : i32
    return %c0_i32, %c0_i32_0 : i32, i32
  }
  func.func @transform_4(%arg0: i32) -> (i32, i32) {
    %c0_i32 = arith.constant 0 : i32
    %c0_i32_0 = arith.constant 0 : i32
    return %c0_i32, %arg0 : i32, i32
  }
}

</mosaic_0001>

<llo_original>
// kernel: tpu_custom_call.1
$region0: #{tpu_custom_call.1}
  #allocation0 [shape = 'u32[]', space=smem, size = 0x4, offset = 0x4, fixed_abs, tag = 'smem constant byte address 0x4 - core index']
  #allocation1 [shape = 'u32[144,128]{1,0:T(1,128)}', space=vmem, size = 0x12000, scoped, tag = 'internal scratch']
  %s0 = inlined_call_operand.vmem [shape: bf16[4,384], index: 0, kind: input, shape index: {}]
  %s1 = inlined_call_operand.vmem [shape: bf16[4,384], index: 1, kind: input, shape index: {}]
  %s2 = inlined_call_operand.vmem [shape: bf16[24,12], index: 2, kind: input, shape index: {}]
  %s3 = inlined_call_operand.vmem [shape: f32[24,1], index: 3, kind: input, shape index: {}]
  %s4 = inlined_call_operand.hbm [shape: f32[8,256], index: 4, kind: output, shape index: {}]
  %s5 = sld [smem:[#allocation0]]
  $region26: #{tpu_custom_call.1} parent=0
    _
  %s7 = ssub.s32 1, %s5
  %s8 = scalar_select 0, %s7, %s5
  $region1: #{tpu_custom_call.1} parent=0
    #allocation2 [shape = 'u8[8192]{0}', space=vmem, size = 0x2000, scoped, tag = 'output window, operand 0, single buffered']
    #allocation3 [shape = 's32[1]{0}', space=sflag, size = 0x4, scoped, tag = 'scoped memory for tpu_custom_call.1']
    %9 = vsyncpa [#allocation3], 0
    // Predicated region
    $region2: #{tpu_custom_call.1} parent=1 // pred_check
      _
    $region3: #{tpu_custom_call.1} parent=1 // pred_check_branch
      %11 = sbr.rel (0) target = $region5
    $region4: #{tpu_custom_call.1} parent=1 // pred_region
      _
    $region5: #{tpu_custom_call.1} parent=1 // pred_fallthru
      _
    // Predicated region
    $region6: #{tpu_custom_call.1} parent=1 // pred_check
      _
    $region7: #{tpu_custom_call.1} parent=1 // pred_check_branch
      %13 = sbr.rel (0) target = $region9
    $region8: #{tpu_custom_call.1} parent=1 // pred_region
      %s14 = sadd.s32 0, 1
      %s15 = smul.u32 %s14, 2
      %p16 = scmp.lt.s32.totalorder %s15, 2
      %s17 = scalar_select %p16, %s15, 2
      %s18 = smul.addr %s17, 2
      %s19 = scalar_lea.vmem %s1, %s18
      %s20 = sadd.s32 0, 1
      %s21 = smul.u32 %s20, 2
    $region9: #{tpu_custom_call.1} parent=1 // pred_fallthru
      _
    // Predicated region
    $region10: #{tpu_custom_call.1} parent=1 // pred_check
      _
    $region11: #{tpu_custom_call.1} parent=1 // pred_check_branch
      %23 = sbr.rel (0) target = $region13
    $region12: #{tpu_custom_call.1} parent=1 // pred_region
      _
    $region13: #{tpu_custom_call.1} parent=1 // pred_fallthru
      _
    // Predicated region
    $region14: #{tpu_custom_call.1} parent=1 // pred_check
      _
    $region15: #{tpu_custom_call.1} parent=1 // pred_check_branch
      %25 = sbr.rel (0) target = $region17
    $region16: #{tpu_custom_call.1} parent=1 // pred_region
      _
    $region17: #{tpu_custom_call.1} parent=1 // pred_fallthru
      _
    %s26 = sadd.s32 0, 1
    %s27 = smul.u32 %s26, 2
    %p28 = scmp.lt.s32.totalorder %s27, 2
    %s29 = scalar_select %p28, %s27, 2
    %s30 = smul.addr %s29, 2
    %s31 = scalar_lea.vmem %s1, %s30
    %s32 = sadd.s32 0, 1
    %s33 = smul.u32 %s32, 2
    %p34 = scmp.lt.s32.totalorder %s33, 2
    %s35 = scalar_select %p34, %s33, 2
    %s36 = smul.addr %s35, 2
    %s37 = scalar_lea.vmem %s1, %s36
    %s38 = sadd.s32 0, 1
    %s39 = smul.u32 %s38, 2
    %v41 = vld [vmem:[%s0] sm:$0xf]
    %v42 = vld [vmem:[%s37] sm:$0x3]
    %v45 = vunpack.c.l.s4 1983009808
    %v46 = vunpack.c.0.s8 %v45
    %v47 = vlaneseq
    %v48 = vshrl.u32 %v47, 7
    %v49 = vsub.s32 %v46, %v48
    %v50 = vrot.slane %v41, %v49
    %v51 = vcombine.high %v50, %v50
    %v52 = vld [vmem:[%s2] sm:$0xf]
    %v53 = vld [vmem:[%s2 + $0x4] sm:$0xf]
    %v54 = vld [vmem:[%s2 + $0x8] sm:$0xf]
    %v58 = vunpack.c.l.b16 %v52
    %v59 = vunpack.c.l.b16 %v53
    %v60 = vunpack.c.l.b16 %v54
    %v61 = vpack.c.b16 %v59, %v58
    %v62 = vpack.c.b16 %v60, %v60
    %63 = vrot.lane.b32.xlu0 %v61, 124
    %v64 = vpop.permute.xlu0 %63
    %65 = vrot.lane.b32.xlu0 %v62, 124
    %v66 = vpop.permute.xlu0 %65
    %68 = vrot.lane.b32.xlu0 %v50, 127
    %v69 = vpop.permute.xlu0 %68
    %70 = vrot.lane.b32.xlu0 %v51, 127
    %v71 = vpop.permute.xlu0 %70
    %72 = vrot.lane.b32.xlu0 %v42, 127
    %v73 = vpop.permute.xlu0 %72
    %vm74 = vcmask 1039360
    %v75 = vsel %vm74, %v69, %v71
    %v76 = vsel %vm74, %v71, %v73
    %vm77 = vcmask 31744
    %v79 = vsel %vm77, %v64, 0
    %v82 = vsel %vm77, %v66, 0
    %vm84 = vcmask 1041408
    %v86 = vsel %vm84, %v75, 0
    %v89 = vsel %vm84, %v76, 0
    %91 = vmatprep.subr.bf16.mxu0 %v89
    %92 = vmatpush1.bf16.msra.mxu0 %v86
    %93 = vmatprep.subr.bf16.mxu0 0
    %94 = vmatpush1.bf16.msra.mxu0 0
    %95 = vmatprep.subr.bf16.mxu0 0
    %96 = vmatpush1.bf16.msra.mxu0 0
    %97 = vmatprep.subr.bf16.mxu0 0
    %98 = vmatpush1.bf16.msra.mxu0 0
    %99 = vmatprep.subr.bf16.mxu0 0
    %100 = vmatpush1.bf16.msra.mxu0 0
    %101 = vmatprep.subr.bf16.mxu0 0
    %102 = vmatpush1.bf16.msra.mxu0 0
    %103 = vmatprep.subr.bf16.mxu0 0
    %104 = vmatpush1.bf16.msra.mxu0 0
    %105 = vmatprep.subr.bf16.mxu0 0
    %106 = vmatpush1.bf16.msra.mxu0 0
    %107 = vmatprep.subr.bf16.mxu0 0
    %108 = vmatpush1.bf16.msra.mxu0 0
    %109 = vmatprep.subr.bf16.mxu0 0
    %110 = vmatpush1.bf16.msra.mxu0 0
    %111 = vmatprep.subr.bf16.mxu0 0
    %112 = vmatpush1.bf16.msra.mxu0 0
    %113 = vmatprep.subr.bf16.mxu0 0
    %114 = vmatpush1.bf16.msra.mxu0 0
    %115 = vmatprep.subr.bf16.mxu0 0
    %116 = vmatpush1.bf16.msra.mxu0 0
    %117 = vmatprep.subr.bf16.mxu0 0
    %118 = vmatpush1.bf16.msra.mxu0 0
    %119 = vmatprep.subr.bf16.mxu0 0
    %120 = vmatpush1.bf16.msra.mxu0 0
    %121 = vmatprep.subr.bf16.mxu0 0
    %122 = vmatpush1.bf16.msra.mxu0 0
    %123 = vmatprep.mubr.bf16.mxu0 0
    %124 = vmatmul.mubr.bf16.gmra.mrb[0].mxu0 %v79
    %v125 = vpop.f32.mrb[0].mxu0
    %v126 = vadd.f32 0.0, %v125
    %v127 = vpop.f32.mrb[0].mxu0
    %v128 = vadd.f32 0.0, %v127
    %v129 = vpop.f32.mrb[0].mxu0
    %v130 = vadd.f32 0.0, %v129
    %v131 = vpop.f32.mrb[0].mxu0
    %v132 = vadd.f32 0.0, %v131
    %133 = vmatprep.mubr.bf16.mxu0 0
    %134 = vmatmul.mubr.bf16.gmra.mrb[0].mxu0 %v82
    %v135 = vpop.f32.mrb[0].mxu0
    %v136 = vadd.f32 0.0, %v135
    %v137 = vpop.f32.mrb[0].mxu0
    %v138 = vadd.f32 0.0, %v137
    %v139 = vpop.f32.mrb[0].mxu0
    %v140 = vpop.f32.mrb[0].mxu0
    %141 = vdwg.mxu0
    %v143 = vsel %vm77, %v61, 0
    %v146 = vsel %vm77, %v62, 0
    %v149 = vsel %vm84, %v50, 0
    %v152 = vsel %vm84, %v51, 0
    %154 = vmatprep.subr.bf16.mxu0 %v152
    %155 = vmatpush1.bf16.msra.mxu0 %v149
    %156 = vmatprep.subr.bf16.mxu0 0
    %157 = vmatpush1.bf16.msra.mxu0 0
    %158 = vmatprep.subr.bf16.mxu0 0
    %159 = vmatpush1.bf16.msra.mxu0 0
    %160 = vmatprep.subr.bf16.mxu0 0
    %161 = vmatpush1.bf16.msra.mxu0 0
    %162 = vmatprep.subr.bf16.mxu0 0
    %163 = vmatpush1.bf16.msra.mxu0 0
    %164 = vmatprep.subr.bf16.mxu0 0
    %165 = vmatpush1.bf16.msra.mxu0 0
    %166 = vmatprep.subr.bf16.mxu0 0
    %167 = vmatpush1.bf16.msra.mxu0 0
    %168 = vmatprep.subr.bf16.mxu0 0
    %169 = vmatpush1.bf16.msra.mxu0 0
    %170 = vmatprep.subr.bf16.mxu0 0
    %171 = vmatpush1.bf16.msra.mxu0 0
    %172 = vmatprep.subr.bf16.mxu0 0
    %173 = vmatpush1.bf16.msra.mxu0 0
    %174 = vmatprep.subr.bf16.mxu0 0
    %175 = vmatpush1.bf16.msra.mxu0 0
    %176 = vmatprep.subr.bf16.mxu0 0
    %177 = vmatpush1.bf16.msra.mxu0 0
    %178 = vmatprep.subr.bf16.mxu0 0
    %179 = vmatpush1.bf16.msra.mxu0 0
    %180 = vmatprep.subr.bf16.mxu0 0
    %181 = vmatpush1.bf16.msra.mxu0 0
    %182 = vmatprep.subr.bf16.mxu0 0
    %183 = vmatpush1.bf16.msra.mxu0 0
    %184 = vmatprep.subr.bf16.mxu0 0
    %185 = vmatpush1.bf16.msra.mxu0 0
    %186 = vmatprep.mubr.bf16.mxu0 0
    %187 = vmatmul.mubr.bf16.gmra.mrb[0].mxu0 %v143
    %v188 = vpop.f32.mrb[0].mxu0
    %v189 = vadd.f32 %v126, %v188
    %v190 = vpop.f32.mrb[0].mxu0
    %v191 = vadd.f32 %v128, %v190
    %v192 = vpop.f32.mrb[0].mxu0
    %v193 = vadd.f32 %v130, %v192
    %v194 = vpop.f32.mrb[0].mxu0
    %v195 = vadd.f32 %v132, %v194
    %196 = vmatprep.mubr.bf16.mxu0 0
    %197 = vmatmul.mubr.bf16.gmra.mrb[0].mxu0 %v146
    %v198 = vpop.f32.mrb[0].mxu0
    %v199 = vadd.f32 %v136, %v198
    %v200 = vpop.f32.mrb[0].mxu0
    %v201 = vadd.f32 %v138, %v200
    %v202 = vpop.f32.mrb[0].mxu0
    %v203 = vpop.f32.mrb[0].mxu0
    %204 = vdwg.mxu0
    %205 = vrot.lane.b32.xlu0 %v61, 120
    %v206 = vpop.permute.xlu0 %205
    %207 = vrot.lane.b32.xlu0 %v62, 120
    %v208 = vpop.permute.xlu0 %207
    %209 = vrot.lane.b32.xlu0 %v50, 126
    %v210 = vpop.permute.xlu0 %209
    %211 = vrot.lane.b32.xlu0 %v51, 126
    %v212 = vpop.permute.xlu0 %211
    %213 = vrot.lane.b32.xlu0 %v42, 126
    %v214 = vpop.permute.xlu0 %213
    %vm215 = vcmask 1031168
    %v216 = vsel %vm215, %v210, %v212
    %v217 = vsel %vm215, %v212, %v214
    %v219 = vsel %vm77, %v206, 0
    %v222 = vsel %vm77, %v208, 0
    %v225 = vsel %vm84, %v216, 0
    %v228 = vsel %vm84, %v217, 0
    %230 = vmatprep.subr.bf16.mxu0 %v228
    %231 = vmatpush1.bf16.msra.mxu0 %v225
    %232 = vmatprep.subr.bf16.mxu0 0
    %233 = vmatpush1.bf16.msra.mxu0 0
    %234 = vmatprep.subr.bf16.mxu0 0
    %235 = vmatpush1.bf16.msra.mxu0 0
    %236 = vmatprep.subr.bf16.mxu0 0
    %237 = vmatpush1.bf16.msra.mxu0 0
    %238 = vmatprep.subr.bf16.mxu0 0
    %239 = vmatpush1.bf16.msra.mxu0 0
    %240 = vmatprep.subr.bf16.mxu0 0
    %241 = vmatpush1.bf16.msra.mxu0 0
    %242 = vmatprep.subr.bf16.mxu0 0
    %243 = vmatpush1.bf16.msra.mxu0 0
    %244 = vmatprep.subr.bf16.mxu0 0
    %245 = vmatpush1.bf16.msra.mxu0 0
    %246 = vmatprep.subr.bf16.mxu0 0
    %247 = vmatpush1.bf16.msra.mxu0 0
    %248 = vmatprep.subr.bf16.mxu0 0
    %249 = vmatpush1.bf16.msra.mxu0 0
    %250 = vmatprep.subr.bf16.mxu0 0
    %251 = vmatpush1.bf16.msra.mxu0 0
    %252 = vmatprep.subr.bf16.mxu0 0
    %253 = vmatpush1.bf16.msra.mxu0 0
    %254 = vmatprep.subr.bf16.mxu0 0
    %255 = vmatpush1.bf16.msra.mxu0 0
    %256 = vmatprep.subr.bf16.mxu0 0
    %257 = vmatpush1.bf16.msra.mxu0 0
    %258 = vmatprep.subr.bf16.mxu0 0
    %259 = vmatpush1.bf16.msra.mxu0 0
    %260 = vmatprep.subr.bf16.mxu0 0
    %261 = vmatpush1.bf16.msra.mxu0 0
    %262 = vmatprep.mubr.bf16.mxu0 0
    %263 = vmatmul.mubr.bf16.gmra.mrb[0].mxu0 %v219
    %v264 = vpop.f32.mrb[0].mxu0
    %v265 = vadd.f32 0.0, %v264
    %v266 = vpop.f32.mrb[0].mxu0
    %v267 = vadd.f32 0.0, %v266
    %v268 = vpop.f32.mrb[0].mxu0
    %v269 = vadd.f32 0.0, %v268
    %v270 = vpop.f32.mrb[0].mxu0
    %v271 = vadd.f32 0.0, %v270
    %272 = vmatprep.mubr.bf16.mxu0 0
    %273 = vmatmul.mubr.bf16.gmra.mrb[0].mxu0 %v222
    %v274 = vpop.f32.mrb[0].mxu0
    %v275 = vadd.f32 0.0, %v274
    %v276 = vpop.f32.mrb[0].mxu0
    %v277 = vadd.f32 0.0, %v276
    %v278 = vpop.f32.mrb[0].mxu0
    %v279 = vpop.f32.mrb[0].mxu0
    %280 = vdwg.mxu0
    %v281 = vadd.f32 %v189, %v265
    %v282 = vadd.f32 %v191, %v267
    %v283 = vadd.f32 %v193, %v269
    %v284 = vadd.f32 %v195, %v271
    %v285 = vadd.f32 %v199, %v275
    %v286 = vadd.f32 %v201, %v277
    %v287 = vld [vmem:[%s3] sm:$0xff]
    %v288 = vld [vmem:[%s3 + $0x8] sm:$0xff]
    %v289 = vld [vmem:[%s3 + $0x10] sm:$0xff]
    %291 = vset.pattern.permute.xlu0 0
    %292 = vperm.xlu0 %291, %v287
    %v293 = vpop.permute.xlu0 %292
    %296 = vset.pattern.permute.xlu0 0
    %297 = vperm.xlu0 %296, %v288
    %v298 = vpop.permute.xlu0 %297
    %301 = vset.pattern.permute.xlu0 0
    %302 = vperm.xlu0 %301, %v289
    %v303 = vpop.permute.xlu0 %302
    %v305 = vadd.f32 %v281, %v293
    %v306 = vadd.f32 %v282, %v293
    %v307 = vadd.f32 %v283, %v298
    %v308 = vadd.f32 %v284, %v298
    %v309 = vadd.f32 %v285, %v303
    %v310 = vadd.f32 %v286, %v303
    %v311 = vsub.f32 0.0, %v307
    %v312 = vsub.f32 0.0, %v308
    %v313 = vmul.f32 %v311, 1.442695
    %v314 = vpow.pop %v313
    %v315 = vmul.f32 %v312, 1.442695
    %v316 = vpow.pop %v315
    %v317 = vadd.f32 %v314, 1.0
    %v318 = vadd.f32 %v316, 1.0
    %v319 = vrcp.pop %v317
    %v320 = vmul.f32 1.0, %v319
    %v321 = vrcp.pop %v318
    %v322 = vmul.f32 1.0, %v321
    %v323 = vadd.f32 %v305, %v320
    %v324 = vadd.f32 %v306, %v322
    %v325 = vadd.f32 %v323, %v309
    %v326 = vadd.f32 %v324, %v310
    %v327 = vmax.f32 %v325, 0.0
    %v328 = vmax.f32 %v326, 0.0
    %329 = vst [vmem:[#allocation2] sm:$0xff] %v327
    %330 = vst [vmem:[#allocation2 + $0x8] sm:$0xff] %v328
    // Predicated region
    $region18: #{tpu_custom_call.1} parent=1 // pred_check
      _
    $region19: #{tpu_custom_call.1} parent=1 // pred_check_branch
      %332 = sbr.rel (0) target = $region21
    $region20: #{tpu_custom_call.1} parent=1 // pred_region
      %s334 = ssub.s32 256, 256
      %335 = vsyncadd [#allocation3], %s334
      %s337 = sshll.u32 [#allocation2], 4
      %s338 = int_to_ptr.vmem [resolvable:$true] %s337
      %340 = dma.vmem_to_hbm [thread:$0]  %s338, 256, %s4, [#allocation3]
    $region21: #{tpu_custom_call.1} parent=1 // pred_fallthru
      _
    // Predicated region
    $region22: #{tpu_custom_call.1} parent=1 // pred_check
      _
    $region23: #{tpu_custom_call.1} parent=1 // pred_check_branch
      %342 = sbr.rel (0) target = $region25
    $region24: #{tpu_custom_call.1} parent=1 // pred_region
      %343 = dma.done [#allocation3], 256
    $region25: #{tpu_custom_call.1} parent=1 // pred_fallthru
      _
    %344 = vsyncpa [#allocation3], 1

</llo_original>
